<compile_context>
chip_gen: v7x
topology: tpu7x:2x2x1
jax: 0.10.0
libtpu: 0.0.40
codegen_flags: <defaults>
</compile_context>

<pallas_src>
import functools

import jax
import jax.numpy as jnp
from jax.experimental import pallas as pl
from jax.experimental.pallas import tpu as pltpu

LN_EPS = 1e-5  # PyTorch LayerNorm default


def _round_up(x, m):
    return (x + m - 1) // m * m


# ---------------------------------------------------------------------------
# Pallas kernel: fused concat + 3-layer MLP (Linear -> LayerNorm -> ReLU x2)
# ---------------------------------------------------------------------------
def _edge_mlp_kernel(
    src_ref, dest_ref, edge_ref, ub_ref,                 # row-streamed inputs
    w1_ref, p1_ref, w2_ref, p2_ref, w3_ref, b3_ref,      # resident params
    o_ref,                                               # [TE, e_outc]
):
    f32 = jnp.float32
    mm_dtype = w1_ref.dtype  # bf16 (fast path) or f32 (parity path)

    # Fused feature concat (lane axis) -- x never makes an HBM round trip.
    x = jnp.concatenate(
        [src_ref[...], dest_ref[...], edge_ref[...], ub_ref[...]], axis=-1)

    p1 = p1_ref[...]                       # [3, h1] = [b1; gamma1; beta1]
    b1, g1, beta1 = p1[0:1], p1[1:2], p1[2:3]
    p2 = p2_ref[...]                       # [3, h2] = [b2; gamma2; beta2]
    b2, g2, beta2 = p2[0:1], p2[1:2], p2[2:3]

    # ---- Linear 1 (single K=dim_in contraction) + LayerNorm + ReLU --------
    h = jnp.dot(x.astype(mm_dtype), w1_ref[...],
                preferred_element_type=f32) + b1
    mu = jnp.mean(h, axis=-1, keepdims=True)
    var = jnp.mean((h - mu) * (h - mu), axis=-1, keepdims=True)  # biased var
    h = (h - mu) * jax.lax.rsqrt(var + LN_EPS)
    h = jnp.maximum(h * g1 + beta1, 0.0)

    # ---- Linear 2 + LayerNorm + ReLU ---------------------------------------
    h = jnp.dot(h.astype(mm_dtype), w2_ref[...],
                preferred_element_type=f32) + b2
    mu = jnp.mean(h, axis=-1, keepdims=True)
    var = jnp.mean((h - mu) * (h - mu), axis=-1, keepdims=True)
    h = (h - mu) * jax.lax.rsqrt(var + LN_EPS)
    h = jnp.maximum(h * g2 + beta2, 0.0)

    # ---- Linear 3 -----------------------------------------------------------
    out = jnp.dot(h.astype(mm_dtype), w3_ref[...],
                  preferred_element_type=f32) + b3_ref[...]
    o_ref[...] = out.astype(o_ref.dtype)


# ---------------------------------------------------------------------------
# Wrapper: JAX/Pallas equivalent of UnconditionedEdgeModel.forward
# ---------------------------------------------------------------------------
@functools.partial(jax.jit, static_argnames=("row_tile", "use_bf16_matmul"))
def unconditioned_edge_model_forward(params, src, dest, edge_attr, u, batch,
                                     winding, *, row_tile=2048,
                                     use_bf16_matmul=True):
    """src/dest: [E,n_inc], edge_attr: [E,e_inc], u: [B,u_inc] (or [u_inc]),
    batch: [E] int, winding: [E,2] (unused).  Returns [E, e_outc] f32."""
    del winding  # not used by UnconditionedEdgeModel
    if u.ndim == 1:
        u = u[None, :]
    f32 = jnp.float32
    src = src.astype(f32)
    dest = dest.astype(f32)
    edge_attr = edge_attr.astype(f32)
    u = u.astype(f32)

    E, n_inc = src.shape
    e_inc = edge_attr.shape[1]
    u_inc = u.shape[1]
    dim_in = 2 * n_inc + e_inc + u_inc

    mm_dtype = jnp.bfloat16 if use_bf16_matmul else f32

    # Matmul weights in the matmul dtype; LN params / biases stay f32
    # (added/applied after f32 accumulation).
    w1 = params["w1"].astype(mm_dtype)       # [dim_in, h1] (kept un-split)
    w2 = params["w2"].astype(mm_dtype)       # [h1, h2]
    w3 = params["w3"].astype(mm_dtype)       # [h2, e_outc]
    h1, h2, e_outc = w1.shape[1], w2.shape[1], w3.shape[1]

    p1 = jnp.concatenate([params["b1"], params["g1"], params["beta1"]],
                         axis=0).astype(f32)               # [3, h1]
    p2 = jnp.concatenate([params["b2"], params["g2"], params["beta2"]],
                         axis=0).astype(f32)               # [3, h2]
    b3 = params["b3"].astype(f32)                          # [1, e_outc]

    # u[batch] gathered once in the wrapper (16 B/row of extra HBM read)
    # instead of a K=B one_hot matmul inside the kernel.
    ub = u[batch.astype(jnp.int32)]                        # [E, u_inc]

    # Row tile: big enough to amortize per-step overhead, small enough to fit
    # comfortably (with double-buffering) inside v7x's 64 MiB/TC VMEM.
    te = int(min(row_tile, _round_up(E, 8)))
    grid = (pl.cdiv(E, te),)

    def row_spec(width):
        return pl.BlockSpec((te, width), lambda i: (i, 0))

    def full_spec(arr):  # fetched once, stays VMEM-resident across the grid
        return pl.BlockSpec(arr.shape, lambda i: (0,) * arr.ndim)

    flops = 2 * E * (dim_in * h1 + h1 * h2 + h2 * e_outc)
    param_bytes = (int(w1.size + w2.size + w3.size) * jnp.dtype(mm_dtype).itemsize
                   + int(p1.size + p2.size + b3.size) * 4)
    bytes_accessed = 4 * E * (dim_in + e_outc) + param_bytes
    cost = pl.CostEstimate(flops=flops, transcendentals=2 * E,
                           bytes_accessed=bytes_accessed)

    return pl.pallas_call(
        _edge_mlp_kernel,
        out_shape=jax.ShapeDtypeStruct((E, e_outc), f32),
        grid=grid,
        in_specs=[
            row_spec(n_inc), row_spec(n_inc), row_spec(e_inc), row_spec(u_inc),
            full_spec(w1), full_spec(p1),
            full_spec(w2), full_spec(p2),
            full_spec(w3), full_spec(b3),
        ],
        out_specs=pl.BlockSpec((te, e_outc), lambda i: (i, 0)),
        compiler_params=pltpu.CompilerParams(
            dimension_semantics=("parallel",),
            vmem_limit_bytes=32 * 1024 * 1024,
        ),
        cost_estimate=cost,
    )(src, dest, edge_attr, ub, w1, p1, w2, p2, w3, b3)


# ---------------------------------------------------------------------------
# Parameter init (shapes match the PyTorch module; weights stored [in, out])
# ---------------------------------------------------------------------------
def init_params(key, dim_in, dim_h1, dim_h2, dim_out):
    ks = jax.random.split(key, 3)

    def lin(k, fan_in, fan_out):
        bound = 1.0 / jnp.sqrt(fan_in)
        kw, kb = jax.random.split(k)
        w = jax.random.uniform(kw, (fan_in, fan_out), jnp.float32, -bound, bound)
        b = jax.random.uniform(kb, (1, fan_out), jnp.float32, -bound, bound)
        return w, b

    w1, b1 = lin(ks[0], dim_in, dim_h1)
    w2, b2 = lin(ks[1], dim_h1, dim_h2)
    w3, b3 = lin(ks[2], dim_h2, dim_out)
    return {
        "w1": w1, "b1": b1,
        "g1": jnp.ones((1, dim_h1), jnp.float32),
        "beta1": jnp.zeros((1, dim_h1), jnp.float32),
        "w2": w2, "b2": b2,
        "g2": jnp.ones((1, dim_h2), jnp.float32),
        "beta2": jnp.zeros((1, dim_h2), jnp.float32),
        "w3": w3, "b3": b3,
    }


# ---------------------------------------------------------------------------
# Pure-JAX reference (matches the PyTorch module in f32)
# ---------------------------------------------------------------------------
def _ref_forward(params, src, dest, edge_attr, u, batch, winding):
    if u.ndim == 1:
        u = u[None, :]
    x = jnp.concatenate([src, dest, edge_attr, u[batch]], axis=1).astype(jnp.float32)

    def ln(h, g, b):
        mu = jnp.mean(h, axis=-1, keepdims=True)
        var = jnp.mean((h - mu) ** 2, axis=-1, keepdims=True)
        return (h - mu) / jnp.sqrt(var + LN_EPS) * g + b

    h = x @ params["w1"] + params["b1"]
    h = jnp.maximum(ln(h, params["g1"], params["beta1"]), 0.0)
    h = h @ params["w2"] + params["b2"]
    h = jnp.maximum(ln(h, params["g2"], params["beta2"]), 0.0)
    return h @ params["w3"] + params["b3"]


if __name__ == "__main__":
    # Config: e_inc=4, n_inc=4, u_inc=4 -> dim_in = 16; hidden [32, 32]; e_outc = 8
    n_inc, e_inc, u_inc = 4, 4, 4
    dim_in = e_inc + 2 * n_inc + u_inc
    dim_h1, dim_h2, dim_out = 32, 32, 8

    key = jax.random.PRNGKey(0)
    kp, kdata = jax.random.split(key)
    params = init_params(kp, dim_in, dim_h1, dim_h2, dim_out)

    def make_inputs(k, E, B):
        ks, kd, ke, ku, kb = jax.random.split(k, 5)
        src = jax.random.normal(ks, (E, n_inc), jnp.float32)
        dest = jax.random.normal(kd, (E, n_inc), jnp.float32)
        edge_attr = jax.random.normal(ke, (E, e_inc), jnp.float32)
        u = jax.random.normal(ku, (B, u_inc), jnp.float32)
        batch = jax.random.randint(kb, (E,), 0, B, jnp.int32)
        winding = jnp.zeros((E, 2), jnp.float32)
        return src, dest, edge_attr, u, batch, winding

    k1, k2 = jax.random.split(kdata)

    # Test 1: tiny problem, single tile, f32 parity path (tight tolerance).
    args1 = make_inputs(k1, 8, 2)
    out1 = jax.block_until_ready(
        unconditioned_edge_model_forward(params, *args1, use_bf16_matmul=False))
    ref1 = _ref_forward(params, *args1)
    assert out1.shape == (8, dim_out)
    assert jnp.allclose(out1, ref1, atol=1e-4, rtol=1e-4), "mismatch (test 1)"

    # Test 2: multiple grid tiles + ragged tail, f32 parity path.
    args2 = make_inputs(k2, 300, 3)
    out2 = jax.block_until_ready(
        unconditioned_edge_model_forward(params, *args2, row_tile=128,
                                         use_bf16_matmul=False))
    ref2 = _ref_forward(params, *args2)
    assert out2.shape == (300, dim_out)
    assert jnp.allclose(out2, ref2, atol=1e-4, rtol=1e-4), "mismatch (test 2)"

    # Test 3: default fast path (bf16 MXU operands, f32 accumulation).
    out3 = jax.block_until_ready(
        unconditioned_edge_model_forward(params, *args2, row_tile=128))
    assert out3.shape == (300, dim_out)
    assert jnp.allclose(out3, ref2, atol=5e-2, rtol=5e-2), "mismatch (test 3)"

    print("KERNEL_OK")
</pallas_src>

<mosaic_0001>
module attributes {stable_mosaic.version = 11 : i64} {
  func.func @_edge_mlp_kernel(%arg0: i32, %arg1: memref<8x4xf32, #tpu.memory_space<vmem>>, %arg2: memref<8x4xf32, #tpu.memory_space<vmem>>, %arg3: memref<8x4xf32, #tpu.memory_space<vmem>>, %arg4: memref<8x4xf32, #tpu.memory_space<vmem>>, %arg5: memref<16x32xf32, #tpu.memory_space<vmem>>, %arg6: memref<3x32xf32, #tpu.memory_space<vmem>>, %arg7: memref<32x32xf32, #tpu.memory_space<vmem>>, %arg8: memref<3x32xf32, #tpu.memory_space<vmem>>, %arg9: memref<32x8xf32, #tpu.memory_space<vmem>>, %arg10: memref<1x8xf32, #tpu.memory_space<vmem>>, %arg11: memref<8x8xf32, #tpu.memory_space<vmem>>) attributes {dimension_semantics = [#tpu.dimension_semantics<parallel>], iteration_bounds = array<i64: 1>, scalar_prefetch = 0 : i64, scratch_operands = 0 : i64, tpu.core_type = #tpu.core_type<tc>, window_params = [{transform_indices = @transform_0, window_bounds = array<i64: 8, 4>}, {transform_indices = @transform_1, window_bounds = array<i64: 8, 4>}, {transform_indices = @transform_2, window_bounds = array<i64: 8, 4>}, {transform_indices = @transform_3, window_bounds = array<i64: 8, 4>}, {pipeline_mode = #tpu.pipeline_mode<synchronous>, transform_indices = @transform_4, window_bounds = array<i64: 16, 32>}, {pipeline_mode = #tpu.pipeline_mode<synchronous>, transform_indices = @transform_5, window_bounds = array<i64: 3, 32>}, {pipeline_mode = #tpu.pipeline_mode<synchronous>, transform_indices = @transform_6, window_bounds = array<i64: 32, 32>}, {pipeline_mode = #tpu.pipeline_mode<synchronous>, transform_indices = @transform_7, window_bounds = array<i64: 3, 32>}, {pipeline_mode = #tpu.pipeline_mode<synchronous>, transform_indices = @transform_8, window_bounds = array<i64: 32, 8>}, {pipeline_mode = #tpu.pipeline_mode<synchronous>, transform_indices = @transform_9, window_bounds = array<i64: 1, 8>}, {transform_indices = @transform_10, window_bounds = array<i64: 8, 8>}]} {
    %c0 = arith.constant 0 : index
    %c0_0 = arith.constant 0 : index
    %0 = vector.load %arg1[%c0, %c0_0] : memref<8x4xf32, #tpu.memory_space<vmem>>, vector<8x4xf32>
    %c0_1 = arith.constant 0 : index
    %c0_2 = arith.constant 0 : index
    %1 = vector.load %arg2[%c0_1, %c0_2] : memref<8x4xf32, #tpu.memory_space<vmem>>, vector<8x4xf32>
    %c0_3 = arith.constant 0 : index
    %c0_4 = arith.constant 0 : index
    %2 = vector.load %arg3[%c0_3, %c0_4] : memref<8x4xf32, #tpu.memory_space<vmem>>, vector<8x4xf32>
    %c0_5 = arith.constant 0 : index
    %c0_6 = arith.constant 0 : index
    %3 = vector.load %arg4[%c0_5, %c0_6] : memref<8x4xf32, #tpu.memory_space<vmem>>, vector<8x4xf32>
    %4 = tpu.concatenate %0, %1, %2, %3 in 1 : vector<8x4xf32>, vector<8x4xf32>, vector<8x4xf32>, vector<8x4xf32> -> vector<8x16xf32>
    %c0_7 = arith.constant 0 : index
    %c0_8 = arith.constant 0 : index
    %5 = vector.load %arg6[%c0_7, %c0_8] : memref<3x32xf32, #tpu.memory_space<vmem>>, vector<3x32xf32>
    %6 = vector.extract_strided_slice %5 {offsets = [0, 0], sizes = [1, 32], strides = [1, 1]} : vector<3x32xf32> to vector<1x32xf32>
    %7 = vector.extract_strided_slice %5 {offsets = [1, 0], sizes = [1, 32], strides = [1, 1]} : vector<3x32xf32> to vector<1x32xf32>
    %8 = vector.extract_strided_slice %5 {offsets = [2, 0], sizes = [1, 32], strides = [1, 1]} : vector<3x32xf32> to vector<1x32xf32>
    %c0_9 = arith.constant 0 : index
    %c0_10 = arith.constant 0 : index
    %9 = vector.load %arg8[%c0_9, %c0_10] : memref<3x32xf32, #tpu.memory_space<vmem>>, vector<3x32xf32>
    %10 = vector.extract_strided_slice %9 {offsets = [0, 0], sizes = [1, 32], strides = [1, 1]} : vector<3x32xf32> to vector<1x32xf32>
    %11 = vector.extract_strided_slice %9 {offsets = [1, 0], sizes = [1, 32], strides = [1, 1]} : vector<3x32xf32> to vector<1x32xf32>
    %12 = vector.extract_strided_slice %9 {offsets = [2, 0], sizes = [1, 32], strides = [1, 1]} : vector<3x32xf32> to vector<1x32xf32>
    %c0_11 = arith.constant 0 : index
    %c0_12 = arith.constant 0 : index
    %13 = vector.load %arg5[%c0_11, %c0_12] : memref<16x32xf32, #tpu.memory_space<vmem>>, vector<16x32xf32>
    %cst = arith.constant dense<0.000000e+00> : vector<8x32xf32>
    %14 = tpu.matmul %4, %13, %cst {dimension_numbers = #tpu.dot_dimension_numbers<[1], [0], [0], [1], [0, 0, 1, 1], [], []>} : vector<8x16xf32>, vector<16x32xf32>, vector<8x32xf32> -> vector<8x32xf32>
    %15 = vector.broadcast %6 : vector<1x32xf32> to vector<8x32xf32>
    %16 = arith.addf %14, %15 : vector<8x32xf32>
    %cst_13 = arith.constant dense<0.000000e+00> : vector<8xf32>
    %17 = vector.multi_reduction <add>, %16, %cst_13 [1] : vector<8x32xf32> to vector<8xf32>
    %18 = vector.shape_cast %17 : vector<8xf32> to vector<8x1xf32>
    %cst_14 = arith.constant 3.200000e+01 : f32
    %19 = vector.broadcast %cst_14 : f32 to vector<8x1xf32>
    %20 = arith.divf %18, %19 : vector<8x1xf32>
    %21 = vector.broadcast %20 : vector<8x1xf32> to vector<8x32xf32>
    %22 = arith.subf %16, %21 : vector<8x32xf32>
    %23 = vector.broadcast %20 : vector<8x1xf32> to vector<8x32xf32>
    %24 = arith.subf %16, %23 : vector<8x32xf32>
    %25 = arith.mulf %22, %24 : vector<8x32xf32>
    %cst_15 = arith.constant dense<0.000000e+00> : vector<8xf32>
    %26 = vector.multi_reduction <add>, %25, %cst_15 [1] : vector<8x32xf32> to vector<8xf32>
    %27 = vector.shape_cast %26 : vector<8xf32> to vector<8x1xf32>
    %cst_16 = arith.constant 3.200000e+01 : f32
    %28 = vector.broadcast %cst_16 : f32 to vector<8x1xf32>
    %29 = arith.divf %27, %28 : vector<8x1xf32>
    %30 = vector.broadcast %20 : vector<8x1xf32> to vector<8x32xf32>
    %31 = arith.subf %16, %30 : vector<8x32xf32>
    %cst_17 = arith.constant 9.99999974E-6 : f32
    %32 = vector.broadcast %cst_17 : f32 to vector<8x1xf32>
    %33 = arith.addf %29, %32 : vector<8x1xf32>
    %34 = math.rsqrt %33 : vector<8x1xf32>
    %35 = vector.broadcast %34 : vector<8x1xf32> to vector<8x32xf32>
    %36 = arith.mulf %31, %35 : vector<8x32xf32>
    %37 = vector.broadcast %7 : vector<1x32xf32> to vector<8x32xf32>
    %38 = arith.mulf %36, %37 : vector<8x32xf32>
    %39 = vector.broadcast %8 : vector<1x32xf32> to vector<8x32xf32>
    %40 = arith.addf %38, %39 : vector<8x32xf32>
    %cst_18 = arith.constant 0.000000e+00 : f32
    %41 = vector.broadcast %cst_18 : f32 to vector<8x32xf32>
    %42 = arith.maximumf %40, %41 : vector<8x32xf32>
    %c0_19 = arith.constant 0 : index
    %c0_20 = arith.constant 0 : index
    %43 = vector.load %arg7[%c0_19, %c0_20] : memref<32x32xf32, #tpu.memory_space<vmem>>, vector<32x32xf32>
    %cst_21 = arith.constant dense<0.000000e+00> : vector<8x32xf32>
    %44 = tpu.matmul %42, %43, %cst_21 {dimension_numbers = #tpu.dot_dimension_numbers<[1], [0], [0], [1], [0, 0, 1, 1], [], []>} : vector<8x32xf32>, vector<32x32xf32>, vector<8x32xf32> -> vector<8x32xf32>
    %45 = vector.broadcast %10 : vector<1x32xf32> to vector<8x32xf32>
    %46 = arith.addf %44, %45 : vector<8x32xf32>
    %cst_22 = arith.constant dense<0.000000e+00> : vector<8xf32>
    %47 = vector.multi_reduction <add>, %46, %cst_22 [1] : vector<8x32xf32> to vector<8xf32>
    %48 = vector.shape_cast %47 : vector<8xf32> to vector<8x1xf32>
    %cst_23 = arith.constant 3.200000e+01 : f32
    %49 = vector.broadcast %cst_23 : f32 to vector<8x1xf32>
    %50 = arith.divf %48, %49 : vector<8x1xf32>
    %51 = vector.broadcast %50 : vector<8x1xf32> to vector<8x32xf32>
    %52 = arith.subf %46, %51 : vector<8x32xf32>
    %53 = vector.broadcast %50 : vector<8x1xf32> to vector<8x32xf32>
    %54 = arith.subf %46, %53 : vector<8x32xf32>
    %55 = arith.mulf %52, %54 : vector<8x32xf32>
    %cst_24 = arith.constant dense<0.000000e+00> : vector<8xf32>
    %56 = vector.multi_reduction <add>, %55, %cst_24 [1] : vector<8x32xf32> to vector<8xf32>
    %57 = vector.shape_cast %56 : vector<8xf32> to vector<8x1xf32>
    %cst_25 = arith.constant 3.200000e+01 : f32
    %58 = vector.broadcast %cst_25 : f32 to vector<8x1xf32>
    %59 = arith.divf %57, %58 : vector<8x1xf32>
    %60 = vector.broadcast %50 : vector<8x1xf32> to vector<8x32xf32>
    %61 = arith.subf %46, %60 : vector<8x32xf32>
    %cst_26 = arith.constant 9.99999974E-6 : f32
    %62 = vector.broadcast %cst_26 : f32 to vector<8x1xf32>
    %63 = arith.addf %59, %62 : vector<8x1xf32>
    %64 = math.rsqrt %63 : vector<8x1xf32>
    %65 = vector.broadcast %64 : vector<8x1xf32> to vector<8x32xf32>
    %66 = arith.mulf %61, %65 : vector<8x32xf32>
    %67 = vector.broadcast %11 : vector<1x32xf32> to vector<8x32xf32>
    %68 = arith.mulf %66, %67 : vector<8x32xf32>
    %69 = vector.broadcast %12 : vector<1x32xf32> to vector<8x32xf32>
    %70 = arith.addf %68, %69 : vector<8x32xf32>
    %cst_27 = arith.constant 0.000000e+00 : f32
    %71 = vector.broadcast %cst_27 : f32 to vector<8x32xf32>
    %72 = arith.maximumf %70, %71 : vector<8x32xf32>
    %c0_28 = arith.constant 0 : index
    %c0_29 = arith.constant 0 : index
    %73 = vector.load %arg9[%c0_28, %c0_29] : memref<32x8xf32, #tpu.memory_space<vmem>>, vector<32x8xf32>
    %cst_30 = arith.constant dense<0.000000e+00> : vector<8x8xf32>
    %74 = tpu.matmul %72, %73, %cst_30 {dimension_numbers = #tpu.dot_dimension_numbers<[1], [0], [0], [1], [0, 0, 1, 1], [], []>} : vector<8x32xf32>, vector<32x8xf32>, vector<8x8xf32> -> vector<8x8xf32>
    %c0_31 = arith.constant 0 : index
    %c0_32 = arith.constant 0 : index
    %75 = vector.load %arg10[%c0_31, %c0_32] : memref<1x8xf32, #tpu.memory_space<vmem>>, vector<1x8xf32>
    %76 = vector.broadcast %75 : vector<1x8xf32> to vector<8x8xf32>
    %77 = arith.addf %74, %76 : vector<8x8xf32>
    %c0_33 = arith.constant 0 : index
    %c0_34 = arith.constant 0 : index
    %78 = vector.load %arg11[%c0_33, %c0_34] : memref<8x8xf32, #tpu.memory_space<vmem>>, vector<8x8xf32>
    tpu.vector_store %arg11[%c0_33, %c0_34], %77 {strides = array<i32>} : memref<8x8xf32, #tpu.memory_space<vmem>>, vector<8x8xf32>,
    return
  }
  func.func @transform_0(%arg0: i32) -> (i32, i32) {
    %c0_i32 = arith.constant 0 : i32
    %c0_i32_0 = arith.constant 0 : i32
    return %arg0, %c0_i32 : i32, i32
  }
  func.func @transform_1(%arg0: i32) -> (i32, i32) {
    %c0_i32 = arith.constant 0 : i32
    %c0_i32_0 = arith.constant 0 : i32
    return %arg0, %c0_i32 : i32, i32
  }
  func.func @transform_2(%arg0: i32) -> (i32, i32) {
    %c0_i32 = arith.constant 0 : i32
    %c0_i32_0 = arith.constant 0 : i32
    return %arg0, %c0_i32 : i32, i32
  }
  func.func @transform_3(%arg0: i32) -> (i32, i32) {
    %c0_i32 = arith.constant 0 : i32
    %c0_i32_0 = arith.constant 0 : i32
    return %arg0, %c0_i32 : i32, i32
  }
  func.func @transform_4(%arg0: i32) -> (i32, i32) {
    %c0_i32 = arith.constant 0 : i32
    %c0_i32_0 = arith.constant 0 : i32
    %c0_i32_1 = arith.constant 0 : i32
    return %c0_i32, %c0_i32_0 : i32, i32
  }
  func.func @transform_5(%arg0: i32) -> (i32, i32) {
    %c0_i32 = arith.constant 0 : i32
    %c0_i32_0 = arith.constant 0 : i32
    %c0_i32_1 = arith.constant 0 : i32
    return %c0_i32, %c0_i32_0 : i32, i32
  }
  func.func @transform_6(%arg0: i32) -> (i32, i32) {
    %c0_i32 = arith.constant 0 : i32
    %c0_i32_0 = arith.constant 0 : i32
    %c0_i32_1 = arith.constant 0 : i32
    return %c0_i32, %c0_i32_0 : i32, i32
  }
  func.func @transform_7(%arg0: i32) -> (i32, i32) {
    %c0_i32 = arith.constant 0 : i32
    %c0_i32_0 = arith.constant 0 : i32
    %c0_i32_1 = arith.constant 0 : i32
    return %c0_i32, %c0_i32_0 : i32, i32
  }
  func.func @transform_8(%arg0: i32) -> (i32, i32) {
    %c0_i32 = arith.constant 0 : i32
    %c0_i32_0 = arith.constant 0 : i32
    %c0_i32_1 = arith.constant 0 : i32
    return %c0_i32, %c0_i32_0 : i32, i32
  }
  func.func @transform_9(%arg0: i32) -> (i32, i32) {
    %c0_i32 = arith.constant 0 : i32
    %c0_i32_0 = arith.constant 0 : i32
    %c0_i32_1 = arith.constant 0 : i32
    return %c0_i32, %c0_i32_0 : i32, i32
  }
  func.func @transform_10(%arg0: i32) -> (i32, i32) {
    %c0_i32 = arith.constant 0 : i32
    %c0_i32_0 = arith.constant 0 : i32
    return %arg0, %c0_i32 : i32, i32
  }
}

</mosaic_0001>

<llo_original>
// kernel: unconditioned_edge_model_forward.1
$region0: #{unconditioned_edge_model_forward.1}
  #allocation0 [shape = 'u32[]', space=smem, size = 0x4, offset = 0x4, fixed_abs, tag = 'smem constant byte address 0x4 - core index']
  #allocation1 [shape = 'u32[144,128]{1,0:T(1,128)}', space=vmem, size = 0x12000, scoped, tag = 'internal scratch']
  %s0 = inlined_call_operand.vmem [shape: f32[8,4], index: 0, kind: input, shape index: {}]
  %s1 = inlined_call_operand.vmem [shape: f32[8,4], index: 1, kind: input, shape index: {}]
  %s2 = inlined_call_operand.vmem [shape: f32[8,4], index: 2, kind: input, shape index: {}]
  %s3 = inlined_call_operand.vmem [shape: f32[8,4], index: 3, kind: input, shape index: {}]
  %s4 = inlined_call_operand.vmem [shape: f32[16,32], index: 4, kind: input, shape index: {}]
  %s5 = inlined_call_operand.vmem [shape: f32[3,32], index: 5, kind: input, shape index: {}]
  %s6 = inlined_call_operand.vmem [shape: f32[32,32], index: 6, kind: input, shape index: {}]
  %s7 = inlined_call_operand.vmem [shape: f32[3,32], index: 7, kind: input, shape index: {}]
  %s8 = inlined_call_operand.vmem [shape: f32[32,8], index: 8, kind: input, shape index: {}]
  %s9 = inlined_call_operand.vmem [shape: f32[1,8], index: 9, kind: input, shape index: {}]
  %s10 = inlined_call_operand.hbm [shape: f32[8,8], index: 10, kind: output, shape index: {}]
  %s11 = sld [smem:[#allocation0]]
  $region50: #{unconditioned_edge_model_forward.1} parent=0
    _
  %s13 = ssub.s32 1, %s11
  %s14 = scalar_select 0, %s13, %s11
  $region1: #{unconditioned_edge_model_forward.1} parent=0
    #allocation2 [shape = 'u8[4096]{0}', space=vmem, size = 0x1000, scoped, tag = 'output window, operand 0, single buffered']
    #allocation3 [shape = 's32[1]{0}', space=sflag, size = 0x4, scoped, tag = 'scoped memory for unconditioned_edge_model_forward.1']
    %15 = vsyncpa [#allocation3], 0
    // Predicated region
    $region2: #{unconditioned_edge_model_forward.1} parent=1 // pred_check
      _
    $region3: #{unconditioned_edge_model_forward.1} parent=1 // pred_check_branch
      %17 = sbr.rel (0) target = $region5
    $region4: #{unconditioned_edge_model_forward.1} parent=1 // pred_region
      _
    $region5: #{unconditioned_edge_model_forward.1} parent=1 // pred_fallthru
      _
    // Predicated region
    $region6: #{unconditioned_edge_model_forward.1} parent=1 // pred_check
      _
    $region7: #{unconditioned_edge_model_forward.1} parent=1 // pred_check_branch
      %19 = sbr.rel (0) target = $region9
    $region8: #{unconditioned_edge_model_forward.1} parent=1 // pred_region
      _
    $region9: #{unconditioned_edge_model_forward.1} parent=1 // pred_fallthru
      _
    // Predicated region
    $region10: #{unconditioned_edge_model_forward.1} parent=1 // pred_check
      _
    $region11: #{unconditioned_edge_model_forward.1} parent=1 // pred_check_branch
      %21 = sbr.rel (0) target = $region13
    $region12: #{unconditioned_edge_model_forward.1} parent=1 // pred_region
      _
    $region13: #{unconditioned_edge_model_forward.1} parent=1 // pred_fallthru
      _
    // Predicated region
    $region14: #{unconditioned_edge_model_forward.1} parent=1 // pred_check
      _
    $region15: #{unconditioned_edge_model_forward.1} parent=1 // pred_check_branch
      %23 = sbr.rel (0) target = $region17
    $region16: #{unconditioned_edge_model_forward.1} parent=1 // pred_region
      _
    $region17: #{unconditioned_edge_model_forward.1} parent=1 // pred_fallthru
      _
    // Predicated region
    $region18: #{unconditioned_edge_model_forward.1} parent=1 // pred_check
      _
    $region19: #{unconditioned_edge_model_forward.1} parent=1 // pred_check_branch
      %25 = sbr.rel (0) target = $region21
    $region20: #{unconditioned_edge_model_forward.1} parent=1 // pred_region
      _
    $region21: #{unconditioned_edge_model_forward.1} parent=1 // pred_fallthru
      _
    // Predicated region
    $region22: #{unconditioned_edge_model_forward.1} parent=1 // pred_check
      _
    $region23: #{unconditioned_edge_model_forward.1} parent=1 // pred_check_branch
      %27 = sbr.rel (0) target = $region25
    $region24: #{unconditioned_edge_model_forward.1} parent=1 // pred_region
      _
    $region25: #{unconditioned_edge_model_forward.1} parent=1 // pred_fallthru
      _
    // Predicated region
    $region26: #{unconditioned_edge_model_forward.1} parent=1 // pred_check
      _
    $region27: #{unconditioned_edge_model_forward.1} parent=1 // pred_check_branch
      %29 = sbr.rel (0) target = $region29
    $region28: #{unconditioned_edge_model_forward.1} parent=1 // pred_region
      _
    $region29: #{unconditioned_edge_model_forward.1} parent=1 // pred_fallthru
      _
    // Predicated region
    $region30: #{unconditioned_edge_model_forward.1} parent=1 // pred_check
      _
    $region31: #{unconditioned_edge_model_forward.1} parent=1 // pred_check_branch
      %31 = sbr.rel (0) target = $region33
    $region32: #{unconditioned_edge_model_forward.1} parent=1 // pred_region
      _
    $region33: #{unconditioned_edge_model_forward.1} parent=1 // pred_fallthru
      _
    // Predicated region
    $region34: #{unconditioned_edge_model_forward.1} parent=1 // pred_check
      _
    $region35: #{unconditioned_edge_model_forward.1} parent=1 // pred_check_branch
      %33 = sbr.rel (0) target = $region37
    $region36: #{unconditioned_edge_model_forward.1} parent=1 // pred_region
      _
    $region37: #{unconditioned_edge_model_forward.1} parent=1 // pred_fallthru
      _
    // Predicated region
    $region38: #{unconditioned_edge_model_forward.1} parent=1 // pred_check
      _
    $region39: #{unconditioned_edge_model_forward.1} parent=1 // pred_check_branch
      %35 = sbr.rel (0) target = $region41
    $region40: #{unconditioned_edge_model_forward.1} parent=1 // pred_region
      _
    $region41: #{unconditioned_edge_model_forward.1} parent=1 // pred_fallthru
      _
    %v36 = vld [vmem:[%s0] sm:$0xff]
    %v37 = vld [vmem:[%s1] sm:$0xff]
    %v38 = vld [vmem:[%s2] sm:$0xff]
    %v39 = vld [vmem:[%s3] sm:$0xff]
    %41 = vrot.lane.b32.xlu0 %v37, 4
    %v42 = vpop.permute.xlu0 %41
    %45 = vrot.lane.b32.xlu0 %v38, 8
    %v46 = vpop.permute.xlu0 %45
    %49 = vrot.lane.b32.xlu0 %v39, 12
    %v50 = vpop.permute.xlu0 %49
    %vm52 = vcmask 31744
    %v53 = vsel %vm52, %v36, %v42
    %vm54 = vcmask 64512
    %v55 = vsel %vm54, %v53, %v46
    %vm56 = vcmask 97280
    %v57 = vsel %vm56, %v55, %v50
    %v58 = vld [vmem:[%s5] sm:$0x7]
    %v59 = vld [vmem:[%s7] sm:$0x7]
    %v60 = vld [vmem:[%s4] sm:$0xff]
    %v61 = vld [vmem:[%s4 + $0x8] sm:$0xff]
    %v62 = vlaneseq
    %v63 = vshrl.u32 %v62, 7
    %v64 = vsub.s32 0, %v63
    %v65 = vrot.slane %v58, %v64
    %vm66 = vcmask 130048
    %v68 = vsel %vm66, %v57, 0
    %70 = vmatprep.subr.mxu0 0.0
    %71 = vmatpush1.msra.mxu0 %v60
    %72 = vmatprep.subr.mxu0 0.0
    %73 = vmatpush1.msra.mxu0 %v61
    %74 = vmatprep.subr.mxu0 0.0
    %75 = vmatpush1.msra.mxu0 0.0
    %76 = vmatprep.subr.mxu0 0.0
    %77 = vmatpush1.msra.mxu0 0.0
    %78 = vmatprep.subr.mxu0 0.0
    %79 = vmatpush1.msra.mxu0 0.0
    %80 = vmatprep.subr.mxu0 0.0
    %81 = vmatpush1.msra.mxu0 0.0
    %82 = vmatprep.subr.mxu0 0.0
    %83 = vmatpush1.msra.mxu0 0.0
    %84 = vmatprep.subr.mxu0 0.0
    %85 = vmatpush1.msra.mxu0 0.0
    %86 = vmatprep.subr.mxu0 0.0
    %87 = vmatpush1.msra.mxu0 0.0
    %88 = vmatprep.subr.mxu0 0.0
    %89 = vmatpush1.msra.mxu0 0.0
    %90 = vmatprep.subr.mxu0 0.0
    %91 = vmatpush1.msra.mxu0 0.0
    %92 = vmatprep.subr.mxu0 0.0
    %93 = vmatpush1.msra.mxu0 0.0
    %94 = vmatprep.subr.mxu0 0.0
    %95 = vmatpush1.msra.mxu0 0.0
    %96 = vmatprep.subr.mxu0 0.0
    %97 = vmatpush1.msra.mxu0 0.0
    %98 = vmatprep.subr.mxu0 0.0
    %99 = vmatpush1.msra.mxu0 0.0
    %100 = vmatprep.subr.mxu0 0.0
    %101 = vmatpush1.msra.mxu0 0.0
    %102 = vmatprep.subr.mxu0 0.0
    %103 = vmatpush1.msra.mxu0 0.0
    %104 = vmatprep.subr.mxu0 0.0
    %105 = vmatpush1.msra.mxu0 0.0
    %106 = vmatprep.subr.mxu0 0.0
    %107 = vmatpush1.msra.mxu0 0.0
    %108 = vmatprep.subr.mxu0 0.0
    %109 = vmatpush1.msra.mxu0 0.0
    %110 = vmatprep.subr.mxu0 0.0
    %111 = vmatpush1.msra.mxu0 0.0
    %112 = vmatprep.subr.mxu0 0.0
    %113 = vmatpush1.msra.mxu0 0.0
    %114 = vmatprep.subr.mxu0 0.0
    %115 = vmatpush1.msra.mxu0 0.0
    %116 = vmatprep.subr.mxu0 0.0
    %117 = vmatpush1.msra.mxu0 0.0
    %118 = vmatprep.subr.mxu0 0.0
    %119 = vmatpush1.msra.mxu0 0.0
    %120 = vmatprep.subr.mxu0 0.0
    %121 = vmatpush1.msra.mxu0 0.0
    %122 = vmatprep.subr.mxu0 0.0
    %123 = vmatpush1.msra.mxu0 0.0
    %124 = vmatprep.subr.mxu0 0.0
    %125 = vmatpush1.msra.mxu0 0.0
    %126 = vmatprep.subr.mxu0 0.0
    %127 = vmatpush1.msra.mxu0 0.0
    %128 = vmatprep.subr.mxu0 0.0
    %129 = vmatpush1.msra.mxu0 0.0
    %130 = vmatprep.subr.mxu0 0.0
    %131 = vmatpush1.msra.mxu0 0.0
    %132 = vmatprep.subr.mxu0 0.0
    %133 = vmatpush1.msra.mxu0 0.0
    %134 = vmatprep.mubr.f32.mxu0 0.0
    %135 = vmatmul.mubr.f32.gmra.mrb[0].mxu0 %v68
    %v136 = vpop.f32.mrb[0].mxu0
    %v137 = vadd.f32 %v65, %v136
    %v138 = vpop.f32.mrb[0].mxu0
    %139 = vdwg.mxu0
    %vm140 = vcmask 261120
    %v141 = vsel %vm140, %v137, 0.0
    %142 = vadd.xlane.f32.xlu0 %v141
    %v143 = vpop.xlane.xlu0 %142
    %v144 = vrcp.pop 32.0
    %v145 = vmul.f32 %v143, %v144
    %v146 = vsub.f32 %v137, %v145
    %v147 = vmul.f32 %v146, %v146
    %v148 = vsel %vm140, %v147, 0.0
    %149 = vadd.xlane.f32.xlu0 %v148
    %v150 = vpop.xlane.xlu0 %149
    %v151 = vmul.f32 %v150, %v144
    %v152 = vadd.f32 %v151, 1e-05
    %v153 = vrsqrt.pop %v152
    %v154 = vmul.f32 %v146, %v153
    %v155 = vlaneseq
    %v156 = vshrl.u32 %v155, 7
    %v157 = vsub.s32 1, %v156
    %v158 = vrot.slane %v58, %v157
    %v159 = vmul.f32 %v154, %v158
    %v160 = vlaneseq
    %v161 = vshrl.u32 %v160, 7
    %v162 = vsub.s32 2, %v161
    %v163 = vrot.slane %v58, %v162
    %v164 = vadd.f32 %v159, %v163
    %v165 = vmax.f32 %v164, 0.0
    %v166 = vld [vmem:[%s6] sm:$0xff]
    %v167 = vld [vmem:[%s6 + $0x8] sm:$0xff]
    %v168 = vld [vmem:[%s6 + $0x10] sm:$0xff]
    %v169 = vld [vmem:[%s6 + $0x18] sm:$0xff]
    %v170 = vlaneseq
    %v171 = vshrl.u32 %v170, 7
    %v172 = vsub.s32 0, %v171
    %v173 = vrot.slane %v59, %v172
    %v175 = vsel %vm140, %v165, 0
    %177 = vmatprep.subr.mxu0 0.0
    %178 = vmatpush1.msra.mxu0 %v166
    %179 = vmatprep.subr.mxu0 0.0
    %180 = vmatpush1.msra.mxu0 %v167
    %181 = vmatprep.subr.mxu0 0.0
    %182 = vmatpush1.msra.mxu0 %v168
    %183 = vmatprep.subr.mxu0 0.0
    %184 = vmatpush1.msra.mxu0 %v169
    %185 = vmatprep.subr.mxu0 0.0
    %186 = vmatpush1.msra.mxu0 0.0
    %187 = vmatprep.subr.mxu0 0.0
    %188 = vmatpush1.msra.mxu0 0.0
    %189 = vmatprep.subr.mxu0 0.0
    %190 = vmatpush1.msra.mxu0 0.0
    %191 = vmatprep.subr.mxu0 0.0
    %192 = vmatpush1.msra.mxu0 0.0
    %193 = vmatprep.subr.mxu0 0.0
    %194 = vmatpush1.msra.mxu0 0.0
    %195 = vmatprep.subr.mxu0 0.0
    %196 = vmatpush1.msra.mxu0 0.0
    %197 = vmatprep.subr.mxu0 0.0
    %198 = vmatpush1.msra.mxu0 0.0
    %199 = vmatprep.subr.mxu0 0.0
    %200 = vmatpush1.msra.mxu0 0.0
    %201 = vmatprep.subr.mxu0 0.0
    %202 = vmatpush1.msra.mxu0 0.0
    %203 = vmatprep.subr.mxu0 0.0
    %204 = vmatpush1.msra.mxu0 0.0
    %205 = vmatprep.subr.mxu0 0.0
    %206 = vmatpush1.msra.mxu0 0.0
    %207 = vmatprep.subr.mxu0 0.0
    %208 = vmatpush1.msra.mxu0 0.0
    %209 = vmatprep.subr.mxu0 0.0
    %210 = vmatpush1.msra.mxu0 0.0
    %211 = vmatprep.subr.mxu0 0.0
    %212 = vmatpush1.msra.mxu0 0.0
    %213 = vmatprep.subr.mxu0 0.0
    %214 = vmatpush1.msra.mxu0 0.0
    %215 = vmatprep.subr.mxu0 0.0
    %216 = vmatpush1.msra.mxu0 0.0
    %217 = vmatprep.subr.mxu0 0.0
    %218 = vmatpush1.msra.mxu0 0.0
    %219 = vmatprep.subr.mxu0 0.0
    %220 = vmatpush1.msra.mxu0 0.0
    %221 = vmatprep.subr.mxu0 0.0
    %222 = vmatpush1.msra.mxu0 0.0
    %223 = vmatprep.subr.mxu0 0.0
    %224 = vmatpush1.msra.mxu0 0.0
    %225 = vmatprep.subr.mxu0 0.0
    %226 = vmatpush1.msra.mxu0 0.0
    %227 = vmatprep.subr.mxu0 0.0
    %228 = vmatpush1.msra.mxu0 0.0
    %229 = vmatprep.subr.mxu0 0.0
    %230 = vmatpush1.msra.mxu0 0.0
    %231 = vmatprep.subr.mxu0 0.0
    %232 = vmatpush1.msra.mxu0 0.0
    %233 = vmatprep.subr.mxu0 0.0
    %234 = vmatpush1.msra.mxu0 0.0
    %235 = vmatprep.subr.mxu0 0.0
    %236 = vmatpush1.msra.mxu0 0.0
    %237 = vmatprep.subr.mxu0 0.0
    %238 = vmatpush1.msra.mxu0 0.0
    %239 = vmatprep.subr.mxu0 0.0
    %240 = vmatpush1.msra.mxu0 0.0
    %241 = vmatprep.mubr.f32.mxu0 0.0
    %242 = vmatmul.mubr.f32.gmra.mrb[0].mxu0 %v175
    %v243 = vpop.f32.mrb[0].mxu0
    %v244 = vadd.f32 %v173, %v243
    %v245 = vpop.f32.mrb[0].mxu0
    %246 = vdwg.mxu0
    %v247 = vsel %vm140, %v244, 0.0
    %248 = vadd.xlane.f32.xlu0 %v247
    %v249 = vpop.xlane.xlu0 %248
    %v250 = vmul.f32 %v249, %v144
    %v251 = vsub.f32 %v244, %v250
    %v252 = vmul.f32 %v251, %v251
    %v253 = vsel %vm140, %v252, 0.0
    %254 = vadd.xlane.f32.xlu0 %v253
    %v255 = vpop.xlane.xlu0 %254
    %v256 = vmul.f32 %v255, %v144
    %v257 = vadd.f32 %v256, 1e-05
    %v258 = vrsqrt.pop %v257
    %v259 = vmul.f32 %v251, %v258
    %v260 = vlaneseq
    %v261 = vshrl.u32 %v260, 7
    %v262 = vsub.s32 1, %v261
    %v263 = vrot.slane %v59, %v262
    %v264 = vmul.f32 %v259, %v263
    %v265 = vlaneseq
    %v266 = vshrl.u32 %v265, 7
    %v267 = vsub.s32 2, %v266
    %v268 = vrot.slane %v59, %v267
    %v269 = vadd.f32 %v264, %v268
    %v270 = vmax.f32 %v269, 0.0
    %v271 = vld [vmem:[%s8] sm:$0xff]
    %v272 = vld [vmem:[%s8 + $0x8] sm:$0xff]
    %v273 = vld [vmem:[%s8 + $0x10] sm:$0xff]
    %v274 = vld [vmem:[%s8 + $0x18] sm:$0xff]
    %v275 = vld [vmem:[%s9] sm:$0x1]
    %v277 = vlaneseq
    %v278 = vshrl.u32 %v277, 7
    %v279 = vsub.s32 0, %v278
    %v280 = vrot.slane %v275, %v279
    %v283 = vsel %vm140, %v270, 0
    %285 = vmatprep.subr.mxu0 0.0
    %286 = vmatpush1.msra.mxu0 %v271
    %287 = vmatprep.subr.mxu0 0.0
    %288 = vmatpush1.msra.mxu0 %v272
    %289 = vmatprep.subr.mxu0 0.0
    %290 = vmatpush1.msra.mxu0 %v273
    %291 = vmatprep.subr.mxu0 0.0
    %292 = vmatpush1.msra.mxu0 %v274
    %293 = vmatprep.subr.mxu0 0.0
    %294 = vmatpush1.msra.mxu0 0.0
    %295 = vmatprep.subr.mxu0 0.0
    %296 = vmatpush1.msra.mxu0 0.0
    %297 = vmatprep.subr.mxu0 0.0
    %298 = vmatpush1.msra.mxu0 0.0
    %299 = vmatprep.subr.mxu0 0.0
    %300 = vmatpush1.msra.mxu0 0.0
    %301 = vmatprep.subr.mxu0 0.0
    %302 = vmatpush1.msra.mxu0 0.0
    %303 = vmatprep.subr.mxu0 0.0
    %304 = vmatpush1.msra.mxu0 0.0
    %305 = vmatprep.subr.mxu0 0.0
    %306 = vmatpush1.msra.mxu0 0.0
    %307 = vmatprep.subr.mxu0 0.0
    %308 = vmatpush1.msra.mxu0 0.0
    %309 = vmatprep.subr.mxu0 0.0
    %310 = vmatpush1.msra.mxu0 0.0
    %311 = vmatprep.subr.mxu0 0.0
    %312 = vmatpush1.msra.mxu0 0.0
    %313 = vmatprep.subr.mxu0 0.0
    %314 = vmatpush1.msra.mxu0 0.0
    %315 = vmatprep.subr.mxu0 0.0
    %316 = vmatpush1.msra.mxu0 0.0
    %317 = vmatprep.subr.mxu0 0.0
    %318 = vmatpush1.msra.mxu0 0.0
    %319 = vmatprep.subr.mxu0 0.0
    %320 = vmatpush1.msra.mxu0 0.0
    %321 = vmatprep.subr.mxu0 0.0
    %322 = vmatpush1.msra.mxu0 0.0
    %323 = vmatprep.subr.mxu0 0.0
    %324 = vmatpush1.msra.mxu0 0.0
    %325 = vmatprep.subr.mxu0 0.0
    %326 = vmatpush1.msra.mxu0 0.0
    %327 = vmatprep.subr.mxu0 0.0
    %328 = vmatpush1.msra.mxu0 0.0
    %329 = vmatprep.subr.mxu0 0.0
    %330 = vmatpush1.msra.mxu0 0.0
    %331 = vmatprep.subr.mxu0 0.0
    %332 = vmatpush1.msra.mxu0 0.0
    %333 = vmatprep.subr.mxu0 0.0
    %334 = vmatpush1.msra.mxu0 0.0
    %335 = vmatprep.subr.mxu0 0.0
    %336 = vmatpush1.msra.mxu0 0.0
    %337 = vmatprep.subr.mxu0 0.0
    %338 = vmatpush1.msra.mxu0 0.0
    %339 = vmatprep.subr.mxu0 0.0
    %340 = vmatpush1.msra.mxu0 0.0
    %341 = vmatprep.subr.mxu0 0.0
    %342 = vmatpush1.msra.mxu0 0.0
    %343 = vmatprep.subr.mxu0 0.0
    %344 = vmatpush1.msra.mxu0 0.0
    %345 = vmatprep.subr.mxu0 0.0
    %346 = vmatpush1.msra.mxu0 0.0
    %347 = vmatprep.subr.mxu0 0.0
    %348 = vmatpush1.msra.mxu0 0.0
    %349 = vmatprep.mubr.f32.mxu0 0.0
    %350 = vmatmul.mubr.f32.gmra.mrb[0].mxu0 %v283
    %v351 = vpop.f32.mrb[0].mxu0
    %v352 = vadd.f32 %v280, %v351
    %v353 = vpop.f32.mrb[0].mxu0
    %354 = vdwg.mxu0
    %355 = vst.msk [vmem:[#allocation2] sm:$0xff] %vm54, %v352
    // Predicated region
    $region42: #{unconditioned_edge_model_forward.1} parent=1 // pred_check
      _
    $region43: #{unconditioned_edge_model_forward.1} parent=1 // pred_check_branch
      %357 = sbr.rel (0) target = $region45
    $region44: #{unconditioned_edge_model_forward.1} parent=1 // pred_region
      %s359 = ssub.s32 128, 128
      %360 = vsyncadd [#allocation3], %s359
      %s362 = sshll.u32 [#allocation2], 4
      %s363 = int_to_ptr.vmem [resolvable:$true] %s362
      %365 = dma.vmem_to_hbm [thread:$0]  %s363, 128, %s10, [#allocation3]
    $region45: #{unconditioned_edge_model_forward.1} parent=1 // pred_fallthru
      _
    // Predicated region
    $region46: #{unconditioned_edge_model_forward.1} parent=1 // pred_check
      _
    $region47: #{unconditioned_edge_model_forward.1} parent=1 // pred_check_branch
      %367 = sbr.rel (0) target = $region49
    $region48: #{unconditioned_edge_model_forward.1} parent=1 // pred_region
      %368 = dma.done [#allocation3], 128
    $region49: #{unconditioned_edge_model_forward.1} parent=1 // pred_fallthru
      _
    %369 = vsyncpa [#allocation3], 1

</llo_original>
